<compile_context>
chip_gen: v7x
topology: tpu7x:2x2x1
jax: 0.10.0
libtpu: 0.0.40
codegen_flags: <defaults>
</compile_context>

<pallas_src>
from functools import partial

import jax
import jax.numpy as jnp
from jax.experimental import pallas as pl
from jax.experimental.pallas import tpu as pltpu


def _round_up(n, m):
    return ((n + m - 1) // m) * m


def domain_classifier_kernel(x_ref, w1_ref, b1_ref, w2_ref, b2_ref,
                             wout_ref, bout_ref, out_ref, *, h2_size):
    x = x_ref[...].astype(jnp.float32)

    # L2 normalize each row: x * rsqrt(sum(x^2)). rsqrt rides the EUP slot.
    # Matches the module exactly (no eps, same as x / x.norm(dim=1)).
    inv_norm = jax.lax.rsqrt(jnp.sum(x * x, axis=1, keepdims=True))
    xn = x * inv_norm

    # Hidden layer 1: Linear + ReLU
    h1 = jnp.dot(xn, w1_ref[...], preferred_element_type=jnp.float32) + b1_ref[...]
    h1 = jnp.maximum(h1, 0.0)

    # Hidden layer 2: Linear + ReLU
    h2 = jnp.dot(h1, w2_ref[...], preferred_element_type=jnp.float32) + b2_ref[...]
    h2 = jnp.maximum(h2, 0.0)

    # Fused output + skip projection against the stacked weight [[w3],[ws]]
    # with a single pre-summed bias (b3 + bs). Slices are static and
    # sublane-aligned (h2_size = 16).
    w_out = wout_ref[...]
    logits = (jnp.dot(h2, w_out[:h2_size, :], preferred_element_type=jnp.float32)
              + jnp.dot(xn, w_out[h2_size:, :], preferred_element_type=jnp.float32)
              + bout_ref[...])

    out_ref[...] = logits.astype(out_ref.dtype)


def prepare_params(params):
    """One-time fusion of output + skip projections (off the per-call path):
    stacked weight [[w3],[ws]] of shape (H2+E, D) and pre-summed bias b3+bs."""
    w1, b1, w2, b2, w3, b3, ws, bs = params
    w_out = jnp.concatenate([w3.astype(jnp.float32), ws.astype(jnp.float32)], axis=0)
    b_out = (b3 + bs).astype(jnp.float32)
    return (w1, b1, w2, b2, w_out, b_out)


def domain_classifier_forward(x, fused_params, *, tile_b=8192):
    """x: (B, E) float32. fused_params: output of prepare_params()."""
    w1, b1, w2, b2, w_out, b_out = fused_params
    B, E = x.shape
    H2 = w2.shape[1]
    D = w_out.shape[1]

    # Batch tile: multiple of 8 rows, capped at tile_b. No wrapper-side padding
    # of x; the final partial block is handled by Pallas block clipping. Garbage
    # tail rows inside the last tile may produce NaN after rsqrt, but rows never
    # mix (no cross-row reductions) and those output rows are never written.
    TB = min(tile_b, _round_up(B, 8))
    grid = (pl.cdiv(B, TB),)

    def batch_spec(cols):
        return pl.BlockSpec((TB, cols), lambda i: (i, 0))

    def resident_spec(shape):
        nd = len(shape)
        return pl.BlockSpec(shape, lambda i, _nd=nd: (0,) * _nd)

    return pl.pallas_call(
        partial(domain_classifier_kernel, h2_size=H2),
        out_shape=jax.ShapeDtypeStruct((B, D), jnp.float32),
        grid=grid,
        in_specs=[batch_spec(E),
                  resident_spec(w1.shape), resident_spec(b1.shape),
                  resident_spec(w2.shape), resident_spec(b2.shape),
                  resident_spec(w_out.shape), resident_spec(b_out.shape)],
        out_specs=batch_spec(D),
        compiler_params=pltpu.CompilerParams(
            dimension_semantics=("parallel",)),
    )(x, w1, b1, w2, b2, w_out, b_out)


def init_params(key, embedding_size, hidden_sizes, num_domains):
    """Deterministic parameter init. Weights stored as (in, out)."""
    sizes = [embedding_size] + list(hidden_sizes) + [num_domains]
    params = []
    keys = jax.random.split(key, 2 * len(sizes))
    ki = 0
    for fan_in, fan_out in zip(sizes[:-1], sizes[1:]):
        bound = 1.0 / jnp.sqrt(fan_in)
        w = jax.random.uniform(keys[ki], (fan_in, fan_out),
                               minval=-bound, maxval=bound, dtype=jnp.float32)
        ki += 1
        b = jax.random.uniform(keys[ki], (1, fan_out),
                               minval=-bound, maxval=bound, dtype=jnp.float32)
        ki += 1
        params += [w, b]
    # Skip layer: embedding_size -> num_domains
    bound = 1.0 / jnp.sqrt(embedding_size)
    ws = jax.random.uniform(keys[ki], (embedding_size, num_domains),
                            minval=-bound, maxval=bound, dtype=jnp.float32)
    ki += 1
    bs = jax.random.uniform(keys[ki], (1, num_domains),
                            minval=-bound, maxval=bound, dtype=jnp.float32)
    params += [ws, bs]
    return tuple(params)


def reference_forward(x, params):
    """Pure-JAX reference matching the PyTorch forward (eval mode)."""
    w1, b1, w2, b2, w3, b3, ws, bs = params
    xn = x / jnp.linalg.norm(x, axis=1, keepdims=True)
    h1 = jnp.maximum(xn @ w1 + b1, 0.0)
    h2 = jnp.maximum(h1 @ w2 + b2, 0.0)
    logits = h2 @ w3 + b3
    return logits + (xn @ ws + bs)


if __name__ == "__main__":
    # TODO(synk): Dropout/BatchNorm flags are configured off for this instance,
    # so no train-mode stochastic/BN compute is needed in the kernel.
    embedding_size = 32
    hidden_sizes = (32, 16)   # props [1.0, 0.5] of embedding_size
    num_domains = 4

    key = jax.random.PRNGKey(0)
    kx, kp = jax.random.split(key)
    params = init_params(kp, embedding_size, hidden_sizes, num_domains)
    fused = prepare_params(params)

    # Case 1: batch divisible by tile, multiple grid steps (exercises tiling).
    x1 = jax.random.normal(kx, (64, embedding_size), dtype=jnp.float32)
    out1 = jax.block_until_ready(domain_classifier_forward(x1, fused, tile_b=16))
    ref1 = reference_forward(x1, params)
    assert out1.shape == (64, num_domains)
    assert jnp.allclose(out1, ref1, atol=1e-5, rtol=1e-5), "mismatch vs reference (case 1)"

    # Case 2: ragged batch, single partial block (exercises block clipping, default tile).
    x2 = jax.random.normal(jax.random.fold_in(kx, 1),
                           (20, embedding_size), dtype=jnp.float32)
    out2 = jax.block_until_ready(domain_classifier_forward(x2, fused))
    ref2 = reference_forward(x2, params)
    assert out2.shape == (20, num_domains)
    assert jnp.allclose(out2, ref2, atol=1e-5, rtol=1e-5), "mismatch vs reference (case 2)"

    # Case 3: ragged batch with multiple grid steps + partial last block.
    x3 = jax.random.normal(jax.random.fold_in(kx, 2),
                           (100, embedding_size), dtype=jnp.float32)
    out3 = jax.block_until_ready(domain_classifier_forward(x3, fused, tile_b=32))
    ref3 = reference_forward(x3, params)
    assert out3.shape == (100, num_domains)
    assert jnp.allclose(out3, ref3, atol=1e-5, rtol=1e-5), "mismatch vs reference (case 3)"

    print("KERNEL_OK")
</pallas_src>

<mosaic_0001>
module attributes {stable_mosaic.version = 11 : i64} {
  func.func @domain_classifier_kernel(%arg0: i32, %arg1: memref<16x32xf32, #tpu.memory_space<vmem>>, %arg2: memref<32x32xf32, #tpu.memory_space<vmem>>, %arg3: memref<1x32xf32, #tpu.memory_space<vmem>>, %arg4: memref<32x16xf32, #tpu.memory_space<vmem>>, %arg5: memref<1x16xf32, #tpu.memory_space<vmem>>, %arg6: memref<48x4xf32, #tpu.memory_space<vmem>>, %arg7: memref<1x4xf32, #tpu.memory_space<vmem>>, %arg8: memref<16x4xf32, #tpu.memory_space<vmem>>) attributes {dimension_semantics = [#tpu.dimension_semantics<parallel>], iteration_bounds = array<i64: 4>, scalar_prefetch = 0 : i64, scratch_operands = 0 : i64, tpu.core_type = #tpu.core_type<tc>, window_params = [{transform_indices = @transform_0, window_bounds = array<i64: 16, 32>}, {pipeline_mode = #tpu.pipeline_mode<synchronous>, transform_indices = @transform_1, window_bounds = array<i64: 32, 32>}, {pipeline_mode = #tpu.pipeline_mode<synchronous>, transform_indices = @transform_2, window_bounds = array<i64: 1, 32>}, {pipeline_mode = #tpu.pipeline_mode<synchronous>, transform_indices = @transform_3, window_bounds = array<i64: 32, 16>}, {pipeline_mode = #tpu.pipeline_mode<synchronous>, transform_indices = @transform_4, window_bounds = array<i64: 1, 16>}, {pipeline_mode = #tpu.pipeline_mode<synchronous>, transform_indices = @transform_5, window_bounds = array<i64: 48, 4>}, {pipeline_mode = #tpu.pipeline_mode<synchronous>, transform_indices = @transform_6, window_bounds = array<i64: 1, 4>}, {transform_indices = @transform_7, window_bounds = array<i64: 16, 4>}]} {
    %c0 = arith.constant 0 : index
    %c0_0 = arith.constant 0 : index
    %0 = vector.load %arg1[%c0, %c0_0] : memref<16x32xf32, #tpu.memory_space<vmem>>, vector<16x32xf32>
    %1 = arith.mulf %0, %0 : vector<16x32xf32>
    %cst = arith.constant dense<0.000000e+00> : vector<16xf32>
    %2 = vector.multi_reduction <add>, %1, %cst [1] : vector<16x32xf32> to vector<16xf32>
    %3 = vector.shape_cast %2 : vector<16xf32> to vector<16x1xf32>
    %4 = math.rsqrt %3 : vector<16x1xf32>
    %5 = vector.broadcast %4 : vector<16x1xf32> to vector<16x32xf32>
    %6 = arith.mulf %0, %5 : vector<16x32xf32>
    %c0_1 = arith.constant 0 : index
    %c0_2 = arith.constant 0 : index
    %7 = vector.load %arg2[%c0_1, %c0_2] : memref<32x32xf32, #tpu.memory_space<vmem>>, vector<32x32xf32>
    %cst_3 = arith.constant dense<0.000000e+00> : vector<16x32xf32>
    %8 = tpu.matmul %6, %7, %cst_3 {dimension_numbers = #tpu.dot_dimension_numbers<[1], [0], [0], [1], [0, 0, 1, 1], [], []>} : vector<16x32xf32>, vector<32x32xf32>, vector<16x32xf32> -> vector<16x32xf32>
    %c0_4 = arith.constant 0 : index
    %c0_5 = arith.constant 0 : index
    %9 = vector.load %arg3[%c0_4, %c0_5] : memref<1x32xf32, #tpu.memory_space<vmem>>, vector<1x32xf32>
    %10 = vector.broadcast %9 : vector<1x32xf32> to vector<16x32xf32>
    %11 = arith.addf %8, %10 : vector<16x32xf32>
    %cst_6 = arith.constant 0.000000e+00 : f32
    %12 = vector.broadcast %cst_6 : f32 to vector<16x32xf32>
    %13 = arith.maximumf %11, %12 : vector<16x32xf32>
    %c0_7 = arith.constant 0 : index
    %c0_8 = arith.constant 0 : index
    %14 = vector.load %arg4[%c0_7, %c0_8] : memref<32x16xf32, #tpu.memory_space<vmem>>, vector<32x16xf32>
    %cst_9 = arith.constant dense<0.000000e+00> : vector<16x16xf32>
    %15 = tpu.matmul %13, %14, %cst_9 {dimension_numbers = #tpu.dot_dimension_numbers<[1], [0], [0], [1], [0, 0, 1, 1], [], []>} : vector<16x32xf32>, vector<32x16xf32>, vector<16x16xf32> -> vector<16x16xf32>
    %c0_10 = arith.constant 0 : index
    %c0_11 = arith.constant 0 : index
    %16 = vector.load %arg5[%c0_10, %c0_11] : memref<1x16xf32, #tpu.memory_space<vmem>>, vector<1x16xf32>
    %17 = vector.broadcast %16 : vector<1x16xf32> to vector<16x16xf32>
    %18 = arith.addf %15, %17 : vector<16x16xf32>
    %cst_12 = arith.constant 0.000000e+00 : f32
    %19 = vector.broadcast %cst_12 : f32 to vector<16x16xf32>
    %20 = arith.maximumf %18, %19 : vector<16x16xf32>
    %c0_13 = arith.constant 0 : index
    %c0_14 = arith.constant 0 : index
    %21 = vector.load %arg6[%c0_13, %c0_14] : memref<48x4xf32, #tpu.memory_space<vmem>>, vector<48x4xf32>
    %22 = vector.extract_strided_slice %21 {offsets = [0, 0], sizes = [16, 4], strides = [1, 1]} : vector<48x4xf32> to vector<16x4xf32>
    %cst_15 = arith.constant dense<0.000000e+00> : vector<16x4xf32>
    %23 = tpu.matmul %20, %22, %cst_15 {dimension_numbers = #tpu.dot_dimension_numbers<[1], [0], [0], [1], [0, 0, 1, 1], [], []>} : vector<16x16xf32>, vector<16x4xf32>, vector<16x4xf32> -> vector<16x4xf32>
    %24 = vector.extract_strided_slice %21 {offsets = [16, 0], sizes = [32, 4], strides = [1, 1]} : vector<48x4xf32> to vector<32x4xf32>
    %cst_16 = arith.constant dense<0.000000e+00> : vector<16x4xf32>
    %25 = tpu.matmul %6, %24, %cst_16 {dimension_numbers = #tpu.dot_dimension_numbers<[1], [0], [0], [1], [0, 0, 1, 1], [], []>} : vector<16x32xf32>, vector<32x4xf32>, vector<16x4xf32> -> vector<16x4xf32>
    %26 = arith.addf %23, %25 : vector<16x4xf32>
    %c0_17 = arith.constant 0 : index
    %c0_18 = arith.constant 0 : index
    %27 = vector.load %arg7[%c0_17, %c0_18] : memref<1x4xf32, #tpu.memory_space<vmem>>, vector<1x4xf32>
    %28 = vector.broadcast %27 : vector<1x4xf32> to vector<16x4xf32>
    %29 = arith.addf %26, %28 : vector<16x4xf32>
    %c0_19 = arith.constant 0 : index
    %c0_20 = arith.constant 0 : index
    %30 = vector.load %arg8[%c0_19, %c0_20] : memref<16x4xf32, #tpu.memory_space<vmem>>, vector<16x4xf32>
    tpu.vector_store %arg8[%c0_19, %c0_20], %29 {strides = array<i32>} : memref<16x4xf32, #tpu.memory_space<vmem>>, vector<16x4xf32>,
    return
  }
  func.func @transform_0(%arg0: i32) -> (i32, i32) {
    %c0_i32 = arith.constant 0 : i32
    %c0_i32_0 = arith.constant 0 : i32
    return %arg0, %c0_i32 : i32, i32
  }
  func.func @transform_1(%arg0: i32) -> (i32, i32) {
    %c0_i32 = arith.constant 0 : i32
    %c0_i32_0 = arith.constant 0 : i32
    %c0_i32_1 = arith.constant 0 : i32
    return %c0_i32, %c0_i32_0 : i32, i32
  }
  func.func @transform_2(%arg0: i32) -> (i32, i32) {
    %c0_i32 = arith.constant 0 : i32
    %c0_i32_0 = arith.constant 0 : i32
    %c0_i32_1 = arith.constant 0 : i32
    return %c0_i32, %c0_i32_0 : i32, i32
  }
  func.func @transform_3(%arg0: i32) -> (i32, i32) {
    %c0_i32 = arith.constant 0 : i32
    %c0_i32_0 = arith.constant 0 : i32
    %c0_i32_1 = arith.constant 0 : i32
    return %c0_i32, %c0_i32_0 : i32, i32
  }
  func.func @transform_4(%arg0: i32) -> (i32, i32) {
    %c0_i32 = arith.constant 0 : i32
    %c0_i32_0 = arith.constant 0 : i32
    %c0_i32_1 = arith.constant 0 : i32
    return %c0_i32, %c0_i32_0 : i32, i32
  }
  func.func @transform_5(%arg0: i32) -> (i32, i32) {
    %c0_i32 = arith.constant 0 : i32
    %c0_i32_0 = arith.constant 0 : i32
    %c0_i32_1 = arith.constant 0 : i32
    return %c0_i32, %c0_i32_0 : i32, i32
  }
  func.func @transform_6(%arg0: i32) -> (i32, i32) {
    %c0_i32 = arith.constant 0 : i32
    %c0_i32_0 = arith.constant 0 : i32
    %c0_i32_1 = arith.constant 0 : i32
    return %c0_i32, %c0_i32_0 : i32, i32
  }
  func.func @transform_7(%arg0: i32) -> (i32, i32) {
    %c0_i32 = arith.constant 0 : i32
    %c0_i32_0 = arith.constant 0 : i32
    return %arg0, %c0_i32 : i32, i32
  }
}

</mosaic_0001>

<llo_original>
// kernel: tpu_custom_call.1
$region0: #{tpu_custom_call.1}
  #allocation0 [shape = 'u32[]', space=smem, size = 0x4, offset = 0x4, fixed_abs, tag = 'smem constant byte address 0x4 - core index']
  #allocation1 [shape = 'u32[144,128]{1,0:T(1,128)}', space=vmem, size = 0x12000, scoped, tag = 'internal scratch']
  %s0 = inlined_call_operand.vmem [shape: f32[64,32], index: 0, kind: input, shape index: {}]
  %s1 = inlined_call_operand.vmem [shape: f32[32,32], index: 1, kind: input, shape index: {}]
  %s2 = inlined_call_operand.vmem [shape: f32[1,32], index: 2, kind: input, shape index: {}]
  %s3 = inlined_call_operand.vmem [shape: f32[32,16], index: 3, kind: input, shape index: {}]
  %s4 = inlined_call_operand.vmem [shape: f32[1,16], index: 4, kind: input, shape index: {}]
  %s5 = inlined_call_operand.vmem [shape: f32[48,4], index: 5, kind: input, shape index: {}]
  %s6 = inlined_call_operand.vmem [shape: f32[1,4], index: 6, kind: input, shape index: {}]
  %s7 = inlined_call_operand.vmem [shape: f32[64,4], index: 7, kind: output, shape index: {}]
  %s8 = sld [smem:[#allocation0]]
  $region61: #{tpu_custom_call.1} parent=0
    _
  %s10 = ssub.s32 1, %s8
  %s11 = scalar_select 0, %s10, %s8
  loop: start=0, step=1, limit=6
  $region2: #{tpu_custom_call.1} parent=0 // loop_pre_header
    _
  $region3: #{tpu_custom_call.1} parent=0 // loop_header
    %s13 = sphi 0, %s17
    %p14 = scmp.ge.s32.totalorder %s13, 6
    %s23 = sphi 0, %s25
    %s26 = sphi 0, %s23
    %s27 = sphi 0, %s26
    %s43 = sphi 0, %s27
    %s47 = sphi 0, %s47
    %s49 = sphi 0, %s47
    %s50 = sphi 0, %s49
    %s64 = sphi 0, %s50
    %s68 = sphi 0, %s68
    %s70 = sphi 0, %s68
    %s71 = sphi 0, %s70
    %s85 = sphi 0, %s71
    %s89 = sphi 0, %s89
    %s91 = sphi 0, %s89
    %s92 = sphi 0, %s91
    %s106 = sphi 0, %s92
    %s110 = sphi 0, %s110
    %s112 = sphi 0, %s110
    %s113 = sphi 0, %s112
    %s127 = sphi 0, %s113
    %s131 = sphi 0, %s131
    %s133 = sphi 0, %s131
    %s134 = sphi 0, %s133
    %s148 = sphi 0, %s134
    %s152 = sphi 0, %s152
    %s154 = sphi 0, %s152
    %s155 = sphi 0, %s154
    %s169 = sphi 0, %s155
    %s175 = sphi 0, %s177
    %s178 = sphi 0, %s175
    %s179 = sphi 0, %s178
    %s195 = sphi 0, %s179
  $region4: #{tpu_custom_call.1} parent=0 // loop_header_branch
    %16 = sbr.rel (%p14) target = $region8
  $region5: #{tpu_custom_call.1} parent=0 // loop_body
    %s18 = ssub.s32 %s13, 1
    %s19 = ssub.s32 %s13, 2
    %s20 = sadd.s32 %s13, 1
    %s21 = ssub.s32 %s13, %s20
    %p22 = scmp.eq.s32.totalorder %s21, 0
    %s24 = sadd.s32 %s23, 1
    %s25 = scalar_select %p22, %s23, %s24
    %p28 = pneg %p22
    %p29 = scmp.eq.s32.totalorder %s13, 3
    %p30 = por %p28, %p29
    %p31 = scmp.ne.s32.totalorder %s23, %s26
    %p32 = scmp.eq.s32.totalorder %s13, 0
    %p33 = por %p31, %p32
    %p34 = scmp.ne.s32.totalorder %s23, %s26
    %p35 = scmp.eq.s32.totalorder %s18, 3
    %p36 = por %p34, %p35
    %p37 = scmp.ne.s32.totalorder %s26, %s27
    %p38 = scmp.eq.s32.totalorder %s18, 0
    %p39 = por %p37, %p38
    %p40 = scmp.ne.s32.totalorder %s26, %s27
    %p41 = scmp.eq.s32.totalorder %s19, 3
    %p42 = por %p40, %p41
    %p44 = scmp.ne.s32.totalorder %s27, %s43
    %p45 = scmp.eq.s32.totalorder %s19, 0
    %p46 = por %p44, %p45
    %s48 = sadd.s32 %s47, 1
    %p51 = scmp.eq.s32.totalorder %s13, 3
    %p52 = scmp.ne.s32.totalorder %s47, %s49
    %p53 = scmp.eq.s32.totalorder %s13, 0
    %p54 = por %p52, %p53
    %p55 = scmp.ne.s32.totalorder %s47, %s49
    %p56 = scmp.eq.s32.totalorder %s18, 3
    %p57 = por %p55, %p56
    %p58 = scmp.ne.s32.totalorder %s49, %s50
    %p59 = scmp.eq.s32.totalorder %s18, 0
    %p60 = por %p58, %p59
    %p61 = scmp.ne.s32.totalorder %s49, %s50
    %p62 = scmp.eq.s32.totalorder %s19, 3
    %p63 = por %p61, %p62
    %p65 = scmp.ne.s32.totalorder %s50, %s64
    %p66 = scmp.eq.s32.totalorder %s19, 0
    %p67 = por %p65, %p66
    %s69 = sadd.s32 %s68, 1
    %p72 = scmp.eq.s32.totalorder %s13, 3
    %p73 = scmp.ne.s32.totalorder %s68, %s70
    %p74 = scmp.eq.s32.totalorder %s13, 0
    %p75 = por %p73, %p74
    %p76 = scmp.ne.s32.totalorder %s68, %s70
    %p77 = scmp.eq.s32.totalorder %s18, 3
    %p78 = por %p76, %p77
    %p79 = scmp.ne.s32.totalorder %s70, %s71
    %p80 = scmp.eq.s32.totalorder %s18, 0
    %p81 = por %p79, %p80
    %p82 = scmp.ne.s32.totalorder %s70, %s71
    %p83 = scmp.eq.s32.totalorder %s19, 3
    %p84 = por %p82, %p83
    %p86 = scmp.ne.s32.totalorder %s71, %s85
    %p87 = scmp.eq.s32.totalorder %s19, 0
    %p88 = por %p86, %p87
    %s90 = sadd.s32 %s89, 1
    %p93 = scmp.eq.s32.totalorder %s13, 3
    %p94 = scmp.ne.s32.totalorder %s89, %s91
    %p95 = scmp.eq.s32.totalorder %s13, 0
    %p96 = por %p94, %p95
    %p97 = scmp.ne.s32.totalorder %s89, %s91
    %p98 = scmp.eq.s32.totalorder %s18, 3
    %p99 = por %p97, %p98
    %p100 = scmp.ne.s32.totalorder %s91, %s92
    %p101 = scmp.eq.s32.totalorder %s18, 0
    %p102 = por %p100, %p101
    %p103 = scmp.ne.s32.totalorder %s91, %s92
    %p104 = scmp.eq.s32.totalorder %s19, 3
    %p105 = por %p103, %p104
    %p107 = scmp.ne.s32.totalorder %s92, %s106
    %p108 = scmp.eq.s32.totalorder %s19, 0
    %p109 = por %p107, %p108
    %s111 = sadd.s32 %s110, 1
    %p114 = scmp.eq.s32.totalorder %s13, 3
    %p115 = scmp.ne.s32.totalorder %s110, %s112
    %p116 = scmp.eq.s32.totalorder %s13, 0
    %p117 = por %p115, %p116
    %p118 = scmp.ne.s32.totalorder %s110, %s112
    %p119 = scmp.eq.s32.totalorder %s18, 3
    %p120 = por %p118, %p119
    %p121 = scmp.ne.s32.totalorder %s112, %s113
    %p122 = scmp.eq.s32.totalorder %s18, 0
    %p123 = por %p121, %p122
    %p124 = scmp.ne.s32.totalorder %s112, %s113
    %p125 = scmp.eq.s32.totalorder %s19, 3
    %p126 = por %p124, %p125
    %p128 = scmp.ne.s32.totalorder %s113, %s127
    %p129 = scmp.eq.s32.totalorder %s19, 0
    %p130 = por %p128, %p129
    %s132 = sadd.s32 %s131, 1
    %p135 = scmp.eq.s32.totalorder %s13, 3
    %p136 = scmp.ne.s32.totalorder %s131, %s133
    %p137 = scmp.eq.s32.totalorder %s13, 0
    %p138 = por %p136, %p137
    %p139 = scmp.ne.s32.totalorder %s131, %s133
    %p140 = scmp.eq.s32.totalorder %s18, 3
    %p141 = por %p139, %p140
    %p142 = scmp.ne.s32.totalorder %s133, %s134
    %p143 = scmp.eq.s32.totalorder %s18, 0
    %p144 = por %p142, %p143
    %p145 = scmp.ne.s32.totalorder %s133, %s134
    %p146 = scmp.eq.s32.totalorder %s19, 3
    %p147 = por %p145, %p146
    %p149 = scmp.ne.s32.totalorder %s134, %s148
    %p150 = scmp.eq.s32.totalorder %s19, 0
    %p151 = por %p149, %p150
    %s153 = sadd.s32 %s152, 1
    %p156 = scmp.eq.s32.totalorder %s13, 3
    %p157 = scmp.ne.s32.totalorder %s152, %s154
    %p158 = scmp.eq.s32.totalorder %s13, 0
    %p159 = por %p157, %p158
    %p160 = scmp.ne.s32.totalorder %s152, %s154
    %p161 = scmp.eq.s32.totalorder %s18, 3
    %p162 = por %p160, %p161
    %p163 = scmp.ne.s32.totalorder %s154, %s155
    %p164 = scmp.eq.s32.totalorder %s18, 0
    %p165 = por %p163, %p164
    %p166 = scmp.ne.s32.totalorder %s154, %s155
    %p167 = scmp.eq.s32.totalorder %s19, 3
    %p168 = por %p166, %p167
    %p170 = scmp.ne.s32.totalorder %s155, %s169
    %p171 = scmp.eq.s32.totalorder %s19, 0
    %p172 = por %p170, %p171
    %s173 = ssub.s32 %s13, %s20
    %p174 = scmp.eq.s32.totalorder %s173, 0
    %s176 = sadd.s32 %s175, 1
    %s177 = scalar_select %p174, %s175, %s176
    %p180 = pneg %p174
    %p181 = scmp.eq.s32.totalorder %s13, 3
    %p182 = por %p180, %p181
    %p183 = scmp.ne.s32.totalorder %s175, %s178
    %p184 = scmp.eq.s32.totalorder %s13, 0
    %p185 = por %p183, %p184
    %p186 = scmp.ne.s32.totalorder %s175, %s178
    %p187 = scmp.eq.s32.totalorder %s18, 3
    %p188 = por %p186, %p187
    %p189 = scmp.ne.s32.totalorder %s178, %s179
    %p190 = scmp.eq.s32.totalorder %s18, 0
    %p191 = por %p189, %p190
    %p192 = scmp.ne.s32.totalorder %s178, %s179
    %p193 = scmp.eq.s32.totalorder %s19, 3
    %p194 = por %p192, %p193
    %p196 = scmp.ne.s32.totalorder %s179, %s195
    %p197 = scmp.eq.s32.totalorder %s19, 0
    %p198 = por %p196, %p197
    %p199 = scmp.le.s32.totalorder 1, %s13
    %p200 = scmp.lt.s32.totalorder %s13, 5
    %p201 = pnand %p199, %p200
    %p202 = pneg %p201
    // Predicated region
    $region9: #{tpu_custom_call.1} parent=5 // pred_check
      _
    $region10: #{tpu_custom_call.1} parent=5 // pred_check_branch
      %204 = sbr.rel (%p201) target = $region12
    $region11: #{tpu_custom_call.1} parent=5 // pred_region
      %s205 = ssub.s32 %s13, 1
      // Predicated region
      $region13: #{tpu_custom_call.1} parent=11 // pred_check
        %p206 = pneg %p60
      $region14: #{tpu_custom_call.1} parent=11 // pred_check_branch
        %208 = sbr.rel (%p206) target = $region16
      $region15: #{tpu_custom_call.1} parent=11 // pred_region
        _
      $region16: #{tpu_custom_call.1} parent=11 // pred_fallthru
        _
      // Predicated region
      $region17: #{tpu_custom_call.1} parent=11 // pred_check
        %p209 = pneg %p81
      $region18: #{tpu_custom_call.1} parent=11 // pred_check_branch
        %211 = sbr.rel (%p209) target = $region20
      $region19: #{tpu_custom_call.1} parent=11 // pred_region
        _
      $region20: #{tpu_custom_call.1} parent=11 // pred_fallthru
        _
      // Predicated region
      $region21: #{tpu_custom_call.1} parent=11 // pred_check
        %p212 = pneg %p102
      $region22: #{tpu_custom_call.1} parent=11 // pred_check_branch
        %214 = sbr.rel (%p212) target = $region24
      $region23: #{tpu_custom_call.1} parent=11 // pred_region
        _
      $region24: #{tpu_custom_call.1} parent=11 // pred_fallthru
        _
      // Predicated region
      $region25: #{tpu_custom_call.1} parent=11 // pred_check
        %p215 = pneg %p123
      $region26: #{tpu_custom_call.1} parent=11 // pred_check_branch
        %217 = sbr.rel (%p215) target = $region28
      $region27: #{tpu_custom_call.1} parent=11 // pred_region
        _
      $region28: #{tpu_custom_call.1} parent=11 // pred_fallthru
        _
      // Predicated region
      $region29: #{tpu_custom_call.1} parent=11 // pred_check
        %p218 = pneg %p144
      $region30: #{tpu_custom_call.1} parent=11 // pred_check_branch
        %220 = sbr.rel (%p218) target = $region32
      $region31: #{tpu_custom_call.1} parent=11 // pred_region
        _
      $region32: #{tpu_custom_call.1} parent=11 // pred_fallthru
        _
      // Predicated region
      $region33: #{tpu_custom_call.1} parent=11 // pred_check
        %p221 = pneg %p165
      $region34: #{tpu_custom_call.1} parent=11 // pred_check_branch
        %223 = sbr.rel (%p221) target = $region36
      $region35: #{tpu_custom_call.1} parent=11 // pred_region
        _
      $region36: #{tpu_custom_call.1} parent=11 // pred_fallthru
        _
    $region12: #{tpu_custom_call.1} parent=5 // pred_fallthru
      _
    %p224 = scmp.lt.s32.totalorder %s13, 4
    // Predicated region
    $region37: #{tpu_custom_call.1} parent=5 // pred_check
      %p225 = pneg %p224
    $region38: #{tpu_custom_call.1} parent=5 // pred_check_branch
      %227 = sbr.rel (%p225) target = $region40
    $region39: #{tpu_custom_call.1} parent=5 // pred_region
      // Predicated region
      $region41: #{tpu_custom_call.1} parent=39 // pred_check
        %p228 = pneg %p33
      $region42: #{tpu_custom_call.1} parent=39 // pred_check_branch
        %230 = sbr.rel (%p228) target = $region44
      $region43: #{tpu_custom_call.1} parent=39 // pred_region
        %s231 = smul.u32 2, %s13
        %p232 = scmp.lt.s32.totalorder %s231, 7
        %s233 = scalar_select %p232, %s231, 7
        %s234 = smul.addr %s233, 8
        %s235 = scalar_lea.vmem %s0, %s234
        %s236 = smul.u32 2, %s13
      $region44: #{tpu_custom_call.1} parent=39 // pred_fallthru
        _
    $region40: #{tpu_custom_call.1} parent=5 // pred_fallthru
      _
    %p237 = scmp.le.s32.totalorder 1, %s13
    %p238 = scmp.lt.s32.totalorder %s13, 5
    %p239 = pnand %p237, %p238
    %p240 = pneg %p239
    // Predicated region
    $region45: #{tpu_custom_call.1} parent=5 // pred_check
      _
    $region46: #{tpu_custom_call.1} parent=5 // pred_check_branch
      %242 = sbr.rel (%p239) target = $region48
    $region47: #{tpu_custom_call.1} parent=5 // pred_region
      %s243 = ssub.s32 %s13, 1
      %s244 = smul.u32 2, %s18
      %p245 = scmp.lt.s32.totalorder %s244, 7
      %s246 = scalar_select %p245, %s244, 7
      %s247 = smul.addr %s246, 8
      %s248 = scalar_lea.vmem %s0, %s247
      %p249 = pneg %p39
      %p250 = pneg %p36
      %p251 = pneg %p60
      %p252 = pneg %p57
      %p253 = pneg %p81
      %p254 = pneg %p78
      %p255 = pneg %p102
      %p256 = pneg %p99
      %p257 = pneg %p123
      %p258 = pneg %p120
      %p259 = pneg %p144
      %p260 = pneg %p141
      %p261 = pneg %p165
      %p262 = pneg %p162
      %p263 = pneg %p191
      %p264 = pneg %p188
      %s265 = smul.u32 2, %s18
      %p266 = scmp.lt.s32.totalorder %s265, 7
      %s267 = scalar_select %p266, %s265, 7
      %s268 = smul.addr %s267, 8
      %s269 = scalar_lea.vmem %s7, %s268
      %s270 = smul.u32 2, %s18
      %p271 = scmp.lt.s32.totalorder %s270, 7
      %s272 = scalar_select %p271, %s270, 7
      %s273 = smul.addr %s272, 8
      %s274 = scalar_lea.vmem %s0, %s273
      %s275 = smul.u32 2, %s18
      %s276 = smul.u32 2, %s18
      %p277 = scmp.lt.s32.totalorder %s276, 7
      %s278 = scalar_select %p277, %s276, 7
      %s279 = smul.addr %s278, 8
      %s280 = scalar_lea.vmem %s7, %s279
      %s281 = smul.u32 2, %s18
      %v282 = vld [vmem:[%s274] sm:$0xff]
      %v283 = vld [vmem:[%s274 + $0x8] sm:$0xff]
      %v284 = vmul.f32 %v282, %v282
      %v285 = vmul.f32 %v283, %v283
      %vm286 = vcmask 261120
      %v287 = vsel %vm286, %v284, 0.0
      %288 = vadd.xlane.f32.xlu0 %v287
      %v289 = vpop.xlane.xlu0 %288
      %v290 = vsel %vm286, %v285, 0.0
      %291 = vadd.xlane.f32.xlu0 %v290
      %v292 = vpop.xlane.xlu0 %291
      %v293 = vrsqrt.pop %v289
      %v294 = vrsqrt.pop %v292
      %v295 = vmul.f32 %v282, %v293
      %v296 = vmul.f32 %v283, %v294
      %v297 = vld [vmem:[%s1] sm:$0xff]
      %v298 = vld [vmem:[%s1 + $0x8] sm:$0xff]
      %v299 = vld [vmem:[%s1 + $0x10] sm:$0xff]
      %v300 = vld [vmem:[%s1 + $0x18] sm:$0xff]
      %v301 = vld [vmem:[%s2] sm:$0x1]
      %v303 = vlaneseq
      %v304 = vshrl.u32 %v303, 7
      %v305 = vsub.s32 0, %v304
      %v306 = vrot.slane %v301, %v305
      %v309 = vsel %vm286, %v295, 0
      %v312 = vsel %vm286, %v296, 0
      %314 = vmatprep.subr.mxu0 0.0
      %315 = vmatpush1.msra.mxu0 %v297
      %316 = vmatprep.subr.mxu0 0.0
      %317 = vmatpush1.msra.mxu0 %v298
      %318 = vmatprep.subr.mxu0 0.0
      %319 = vmatpush1.msra.mxu0 %v299
      %320 = vmatprep.subr.mxu0 0.0
      %321 = vmatpush1.msra.mxu0 %v300
      %322 = vmatprep.subr.mxu0 0.0
      %323 = vmatpush1.msra.mxu0 0.0
      %324 = vmatprep.subr.mxu0 0.0
      %325 = vmatpush1.msra.mxu0 0.0
      %326 = vmatprep.subr.mxu0 0.0
      %327 = vmatpush1.msra.mxu0 0.0
      %328 = vmatprep.subr.mxu0 0.0
      %329 = vmatpush1.msra.mxu0 0.0
      %330 = vmatprep.subr.mxu0 0.0
      %331 = vmatpush1.msra.mxu0 0.0
      %332 = vmatprep.subr.mxu0 0.0
      %333 = vmatpush1.msra.mxu0 0.0
      %334 = vmatprep.subr.mxu0 0.0
      %335 = vmatpush1.msra.mxu0 0.0
      %336 = vmatprep.subr.mxu0 0.0
      %337 = vmatpush1.msra.mxu0 0.0
      %338 = vmatprep.subr.mxu0 0.0
      %339 = vmatpush1.msra.mxu0 0.0
      %340 = vmatprep.subr.mxu0 0.0
      %341 = vmatpush1.msra.mxu0 0.0
      %342 = vmatprep.subr.mxu0 0.0
      %343 = vmatpush1.msra.mxu0 0.0
      %344 = vmatprep.subr.mxu0 0.0
      %345 = vmatpush1.msra.mxu0 0.0
      %346 = vmatprep.subr.mxu0 0.0
      %347 = vmatpush1.msra.mxu0 0.0
      %348 = vmatprep.subr.mxu0 0.0
      %349 = vmatpush1.msra.mxu0 0.0
      %350 = vmatprep.subr.mxu0 0.0
      %351 = vmatpush1.msra.mxu0 0.0
      %352 = vmatprep.subr.mxu0 0.0
      %353 = vmatpush1.msra.mxu0 0.0
      %354 = vmatprep.subr.mxu0 0.0
      %355 = vmatpush1.msra.mxu0 0.0
      %356 = vmatprep.subr.mxu0 0.0
      %357 = vmatpush1.msra.mxu0 0.0
      %358 = vmatprep.subr.mxu0 0.0
      %359 = vmatpush1.msra.mxu0 0.0
      %360 = vmatprep.subr.mxu0 0.0
      %361 = vmatpush1.msra.mxu0 0.0
      %362 = vmatprep.subr.mxu0 0.0
      %363 = vmatpush1.msra.mxu0 0.0
      %364 = vmatprep.subr.mxu0 0.0
      %365 = vmatpush1.msra.mxu0 0.0
      %366 = vmatprep.subr.mxu0 0.0
      %367 = vmatpush1.msra.mxu0 0.0
      %368 = vmatprep.subr.mxu0 0.0
      %369 = vmatpush1.msra.mxu0 0.0
      %370 = vmatprep.subr.mxu0 0.0
      %371 = vmatpush1.msra.mxu0 0.0
      %372 = vmatprep.subr.mxu0 0.0
      %373 = vmatpush1.msra.mxu0 0.0
      %374 = vmatprep.subr.mxu0 0.0
      %375 = vmatpush1.msra.mxu0 0.0
      %376 = vmatprep.subr.mxu0 0.0
      %377 = vmatpush1.msra.mxu0 0.0
      %378 = vmatprep.mubr.f32.mxu0 0.0
      %379 = vmatmul.mubr.f32.gmra.mrb[0].mxu0 %v309
      %v380 = vpop.f32.mrb[0].mxu0
      %v381 = vadd.f32 %v306, %v380
      %v382 = vpop.f32.mrb[0].mxu0
      %383 = vmatprep.mubr.f32.mxu0 0.0
      %384 = vmatmul.mubr.f32.gmra.mrb[0].mxu0 %v312
      %v385 = vpop.f32.mrb[0].mxu0
      %v386 = vadd.f32 %v306, %v385
      %v387 = vpop.f32.mrb[0].mxu0
      %388 = vdwg.mxu0
      %v389 = vmax.f32 %v381, 0.0
      %v390 = vmax.f32 %v386, 0.0
      %v391 = vld [vmem:[%s3] sm:$0xff]
      %v392 = vld [vmem:[%s3 + $0x8] sm:$0xff]
      %v393 = vld [vmem:[%s3 + $0x10] sm:$0xff]
      %v394 = vld [vmem:[%s3 + $0x18] sm:$0xff]
      %v395 = vld [vmem:[%s4] sm:$0x1]
      %v397 = vlaneseq
      %v398 = vshrl.u32 %v397, 7
      %v399 = vsub.s32 0, %v398
      %v400 = vrot.slane %v395, %v399
      %v403 = vsel %vm286, %v389, 0
      %v406 = vsel %vm286, %v390, 0
      %408 = vmatprep.subr.mxu0 0.0
      %409 = vmatpush1.msra.mxu0 %v391
      %410 = vmatprep.subr.mxu0 0.0
      %411 = vmatpush1.msra.mxu0 %v392
      %412 = vmatprep.subr.mxu0 0.0
      %413 = vmatpush1.msra.mxu0 %v393
      %414 = vmatprep.subr.mxu0 0.0
      %415 = vmatpush1.msra.mxu0 %v394
      %416 = vmatprep.subr.mxu0 0.0
      %417 = vmatpush1.msra.mxu0 0.0
      %418 = vmatprep.subr.mxu0 0.0
      %419 = vmatpush1.msra.mxu0 0.0
      %420 = vmatprep.subr.mxu0 0.0
      %421 = vmatpush1.msra.mxu0 0.0
      %422 = vmatprep.subr.mxu0 0.0
      %423 = vmatpush1.msra.mxu0 0.0
      %424 = vmatprep.subr.mxu0 0.0
      %425 = vmatpush1.msra.mxu0 0.0
      %426 = vmatprep.subr.mxu0 0.0
      %427 = vmatpush1.msra.mxu0 0.0
      %428 = vmatprep.subr.mxu0 0.0
      %429 = vmatpush1.msra.mxu0 0.0
      %430 = vmatprep.subr.mxu0 0.0
      %431 = vmatpush1.msra.mxu0 0.0
      %432 = vmatprep.subr.mxu0 0.0
      %433 = vmatpush1.msra.mxu0 0.0
      %434 = vmatprep.subr.mxu0 0.0
      %435 = vmatpush1.msra.mxu0 0.0
      %436 = vmatprep.subr.mxu0 0.0
      %437 = vmatpush1.msra.mxu0 0.0
      %438 = vmatprep.subr.mxu0 0.0
      %439 = vmatpush1.msra.mxu0 0.0
      %440 = vmatprep.subr.mxu0 0.0
      %441 = vmatpush1.msra.mxu0 0.0
      %442 = vmatprep.subr.mxu0 0.0
      %443 = vmatpush1.msra.mxu0 0.0
      %444 = vmatprep.subr.mxu0 0.0
      %445 = vmatpush1.msra.mxu0 0.0
      %446 = vmatprep.subr.mxu0 0.0
      %447 = vmatpush1.msra.mxu0 0.0
      %448 = vmatprep.subr.mxu0 0.0
      %449 = vmatpush1.msra.mxu0 0.0
      %450 = vmatprep.subr.mxu0 0.0
      %451 = vmatpush1.msra.mxu0 0.0
      %452 = vmatprep.subr.mxu0 0.0
      %453 = vmatpush1.msra.mxu0 0.0
      %454 = vmatprep.subr.mxu0 0.0
      %455 = vmatpush1.msra.mxu0 0.0
      %456 = vmatprep.subr.mxu0 0.0
      %457 = vmatpush1.msra.mxu0 0.0
      %458 = vmatprep.subr.mxu0 0.0
      %459 = vmatpush1.msra.mxu0 0.0
      %460 = vmatprep.subr.mxu0 0.0
      %461 = vmatpush1.msra.mxu0 0.0
      %462 = vmatprep.subr.mxu0 0.0
      %463 = vmatpush1.msra.mxu0 0.0
      %464 = vmatprep.subr.mxu0 0.0
      %465 = vmatpush1.msra.mxu0 0.0
      %466 = vmatprep.subr.mxu0 0.0
      %467 = vmatpush1.msra.mxu0 0.0
      %468 = vmatprep.subr.mxu0 0.0
      %469 = vmatpush1.msra.mxu0 0.0
      %470 = vmatprep.subr.mxu0 0.0
      %471 = vmatpush1.msra.mxu0 0.0
      %472 = vmatprep.mubr.f32.mxu0 0.0
      %473 = vmatmul.mubr.f32.gmra.mrb[0].mxu0 %v403
      %v474 = vpop.f32.mrb[0].mxu0
      %v475 = vadd.f32 %v400, %v474
      %v476 = vpop.f32.mrb[0].mxu0
      %477 = vmatprep.mubr.f32.mxu0 0.0
      %478 = vmatmul.mubr.f32.gmra.mrb[0].mxu0 %v406
      %v479 = vpop.f32.mrb[0].mxu0
      %v480 = vadd.f32 %v400, %v479
      %v481 = vpop.f32.mrb[0].mxu0
      %482 = vdwg.mxu0
      %v483 = vmax.f32 %v475, 0.0
      %v484 = vmax.f32 %v480, 0.0
      %v485 = vld [vmem:[%s5] sm:$0xff]
      %v486 = vld [vmem:[%s5 + $0x8] sm:$0xff]
      %v487 = vld [vmem:[%s5 + $0x10] sm:$0xff]
      %v488 = vld [vmem:[%s5 + $0x18] sm:$0xff]
      %v489 = vld [vmem:[%s5 + $0x20] sm:$0xff]
      %v490 = vld [vmem:[%s5 + $0x28] sm:$0xff]
      %491 = vmatprep.subr.mxu0 0.0
      %492 = vmatpush1.msra.mxu0 %v487
      %493 = vmatprep.subr.mxu0 0.0
      %494 = vmatpush1.msra.mxu0 %v488
      %495 = vmatprep.subr.mxu0 0.0
      %496 = vmatpush1.msra.mxu0 %v489
      %497 = vmatprep.subr.mxu0 0.0
      %498 = vmatpush1.msra.mxu0 %v490
      %499 = vmatprep.subr.mxu0 0.0
      %500 = vmatpush1.msra.mxu0 0.0
      %501 = vmatprep.subr.mxu0 0.0
      %502 = vmatpush1.msra.mxu0 0.0
      %503 = vmatprep.subr.mxu0 0.0
      %504 = vmatpush1.msra.mxu0 0.0
      %505 = vmatprep.subr.mxu0 0.0
      %506 = vmatpush1.msra.mxu0 0.0
      %507 = vmatprep.subr.mxu0 0.0
      %508 = vmatpush1.msra.mxu0 0.0
      %509 = vmatprep.subr.mxu0 0.0
      %510 = vmatpush1.msra.mxu0 0.0
      %511 = vmatprep.subr.mxu0 0.0
      %512 = vmatpush1.msra.mxu0 0.0
      %513 = vmatprep.subr.mxu0 0.0
      %514 = vmatpush1.msra.mxu0 0.0
      %515 = vmatprep.subr.mxu0 0.0
      %516 = vmatpush1.msra.mxu0 0.0
      %517 = vmatprep.subr.mxu0 0.0
      %518 = vmatpush1.msra.mxu0 0.0
      %519 = vmatprep.subr.mxu0 0.0
      %520 = vmatpush1.msra.mxu0 0.0
      %521 = vmatprep.subr.mxu0 0.0
      %522 = vmatpush1.msra.mxu0 0.0
      %523 = vmatprep.subr.mxu0 0.0
      %524 = vmatpush1.msra.mxu0 0.0
      %525 = vmatprep.subr.mxu0 0.0
      %526 = vmatpush1.msra.mxu0 0.0
      %527 = vmatprep.subr.mxu0 0.0
      %528 = vmatpush1.msra.mxu0 0.0
      %529 = vmatprep.subr.mxu0 0.0
      %530 = vmatpush1.msra.mxu0 0.0
      %531 = vmatprep.subr.mxu0 0.0
      %532 = vmatpush1.msra.mxu0 0.0
      %533 = vmatprep.subr.mxu0 0.0
      %534 = vmatpush1.msra.mxu0 0.0
      %535 = vmatprep.subr.mxu0 0.0
      %536 = vmatpush1.msra.mxu0 0.0
      %537 = vmatprep.subr.mxu0 0.0
      %538 = vmatpush1.msra.mxu0 0.0
      %539 = vmatprep.subr.mxu0 0.0
      %540 = vmatpush1.msra.mxu0 0.0
      %541 = vmatprep.subr.mxu0 0.0
      %542 = vmatpush1.msra.mxu0 0.0
      %543 = vmatprep.subr.mxu0 0.0
      %544 = vmatpush1.msra.mxu0 0.0
      %545 = vmatprep.subr.mxu0 0.0
      %546 = vmatpush1.msra.mxu0 0.0
      %547 = vmatprep.subr.mxu0 0.0
      %548 = vmatpush1.msra.mxu0 0.0
      %549 = vmatprep.subr.mxu0 0.0
      %550 = vmatpush1.msra.mxu0 0.0
      %551 = vmatprep.subr.mxu0 0.0
      %552 = vmatpush1.msra.mxu0 0.0
      %553 = vmatprep.subr.mxu0 0.0
      %554 = vmatpush1.msra.mxu0 0.0
      %555 = vmatprep.mubr.f32.mxu0 0.0
      %556 = vmatmul.mubr.f32.gmra.mrb[0].mxu0 %v309
      %v557 = vpop.f32.mrb[0].mxu0
      %v558 = vadd.f32 0.0, %v557
      %v559 = vpop.f32.mrb[0].mxu0
      %560 = vmatprep.mubr.f32.mxu0 0.0
      %561 = vmatmul.mubr.f32.gmra.mrb[0].mxu0 %v312
      %v562 = vpop.f32.mrb[0].mxu0
      %v563 = vadd.f32 0.0, %v562
      %v564 = vpop.f32.mrb[0].mxu0
      %565 = vdwg.mxu0
      %vm566 = vcmask 130048
      %v568 = vsel %vm566, %v483, 0
      %v571 = vsel %vm566, %v484, 0
      %573 = vmatprep.subr.mxu0 0.0
      %574 = vmatpush1.msra.mxu0 %v485
      %575 = vmatprep.subr.mxu0 0.0
      %576 = vmatpush1.msra.mxu0 %v486
      %577 = vmatprep.subr.mxu0 0.0
      %578 = vmatpush1.msra.mxu0 0.0
      %579 = vmatprep.subr.mxu0 0.0
      %580 = vmatpush1.msra.mxu0 0.0
      %581 = vmatprep.subr.mxu0 0.0
      %582 = vmatpush1.msra.mxu0 0.0
      %583 = vmatprep.subr.mxu0 0.0
      %584 = vmatpush1.msra.mxu0 0.0
      %585 = vmatprep.subr.mxu0 0.0
      %586 = vmatpush1.msra.mxu0 0.0
      %587 = vmatprep.subr.mxu0 0.0
      %588 = vmatpush1.msra.mxu0 0.0
      %589 = vmatprep.subr.mxu0 0.0
      %590 = vmatpush1.msra.mxu0 0.0
      %591 = vmatprep.subr.mxu0 0.0
      %592 = vmatpush1.msra.mxu0 0.0
      %593 = vmatprep.subr.mxu0 0.0
      %594 = vmatpush1.msra.mxu0 0.0
      %595 = vmatprep.subr.mxu0 0.0
      %596 = vmatpush1.msra.mxu0 0.0
      %597 = vmatprep.subr.mxu0 0.0
      %598 = vmatpush1.msra.mxu0 0.0
      %599 = vmatprep.subr.mxu0 0.0
      %600 = vmatpush1.msra.mxu0 0.0
      %601 = vmatprep.subr.mxu0 0.0
      %602 = vmatpush1.msra.mxu0 0.0
      %603 = vmatprep.subr.mxu0 0.0
      %604 = vmatpush1.msra.mxu0 0.0
      %605 = vmatprep.subr.mxu0 0.0
      %606 = vmatpush1.msra.mxu0 0.0
      %607 = vmatprep.subr.mxu0 0.0
      %608 = vmatpush1.msra.mxu0 0.0
      %609 = vmatprep.subr.mxu0 0.0
      %610 = vmatpush1.msra.mxu0 0.0
      %611 = vmatprep.subr.mxu0 0.0
      %612 = vmatpush1.msra.mxu0 0.0
      %613 = vmatprep.subr.mxu0 0.0
      %614 = vmatpush1.msra.mxu0 0.0
      %615 = vmatprep.subr.mxu0 0.0
      %616 = vmatpush1.msra.mxu0 0.0
      %617 = vmatprep.subr.mxu0 0.0
      %618 = vmatpush1.msra.mxu0 0.0
      %619 = vmatprep.subr.mxu0 0.0
      %620 = vmatpush1.msra.mxu0 0.0
      %621 = vmatprep.subr.mxu0 0.0
      %622 = vmatpush1.msra.mxu0 0.0
      %623 = vmatprep.subr.mxu0 0.0
      %624 = vmatpush1.msra.mxu0 0.0
      %625 = vmatprep.subr.mxu0 0.0
      %626 = vmatpush1.msra.mxu0 0.0
      %627 = vmatprep.subr.mxu0 0.0
      %628 = vmatpush1.msra.mxu0 0.0
      %629 = vmatprep.subr.mxu0 0.0
      %630 = vmatpush1.msra.mxu0 0.0
      %631 = vmatprep.subr.mxu0 0.0
      %632 = vmatpush1.msra.mxu0 0.0
      %633 = vmatprep.subr.mxu0 0.0
      %634 = vmatpush1.msra.mxu0 0.0
      %635 = vmatprep.subr.mxu0 0.0
      %636 = vmatpush1.msra.mxu0 0.0
      %637 = vmatprep.mubr.f32.mxu0 0.0
      %638 = vmatmul.mubr.f32.gmra.mrb[0].mxu0 %v568
      %v639 = vpop.f32.mrb[0].mxu0
      %v640 = vadd.f32 %v558, %v639
      %v641 = vpop.f32.mrb[0].mxu0
      %642 = vmatprep.mubr.f32.mxu0 0.0
      %643 = vmatmul.mubr.f32.gmra.mrb[0].mxu0 %v571
      %v644 = vpop.f32.mrb[0].mxu0
      %v645 = vadd.f32 %v563, %v644
      %v646 = vpop.f32.mrb[0].mxu0
      %647 = vdwg.mxu0
      %v648 = vld [vmem:[%s6] sm:$0x1]
      %v650 = vlaneseq
      %v651 = vshrl.u32 %v650, 7
      %v652 = vsub.s32 0, %v651
      %v653 = vrot.slane %v648, %v652
      %v655 = vadd.f32 %v640, %v653
      %v656 = vadd.f32 %v645, %v653
      %vm657 = vcmask 31744
      %658 = vst.msk [vmem:[%s280] sm:$0xff] %vm657, %v655
      %659 = vst.msk [vmem:[%s280 + $0x8] sm:$0xff] %vm657, %v656
      %s660 = smul.u32 2, %s18
      %p661 = scmp.lt.s32.totalorder %s660, 7
      %s662 = scalar_select %p661, %s660, 7
      %s663 = smul.addr %s662, 8
      %s664 = scalar_lea.vmem %s7, %s663
      // Predicated region
      $region49: #{tpu_custom_call.1} parent=47 // pred_check
        %p665 = pneg %p188
      $region50: #{tpu_custom_call.1} parent=47 // pred_check_branch
        %667 = sbr.rel (%p665) target = $region52
      $region51: #{tpu_custom_call.1} parent=47 // pred_region
        %s668 = smul.u32 2, %s18
      $region52: #{tpu_custom_call.1} parent=47 // pred_fallthru
        _
    $region48: #{tpu_custom_call.1} parent=5 // pred_fallthru
      _
    %p669 = scmp.le.s32.totalorder 2, %s13
    // Predicated region
    $region53: #{tpu_custom_call.1} parent=5 // pred_check
      %p670 = pneg %p669
    $region54: #{tpu_custom_call.1} parent=5 // pred_check_branch
      %672 = sbr.rel (%p670) target = $region56
    $region55: #{tpu_custom_call.1} parent=5 // pred_region
      %s673 = ssub.s32 %s13, 2
      // Predicated region
      $region57: #{tpu_custom_call.1} parent=55 // pred_check
        %p674 = pneg %p194
      $region58: #{tpu_custom_call.1} parent=55 // pred_check_branch
        %676 = sbr.rel (%p674) target = $region60
      $region59: #{tpu_custom_call.1} parent=55 // pred_region
        %s677 = smul.u32 2, %s19
        %p678 = scmp.lt.s32.totalorder %s677, 7
        %s679 = scalar_select %p678, %s677, 7
        %s680 = smul.addr %s679, 8
        %s681 = scalar_lea.vmem %s7, %s680
      $region60: #{tpu_custom_call.1} parent=55 // pred_fallthru
        _
    $region56: #{tpu_custom_call.1} parent=5 // pred_fallthru
      _
  $region6: #{tpu_custom_call.1} parent=0 // loop_footer
    %s17 = sadd.s32 1, %s13
  $region7: #{tpu_custom_call.1} parent=0 // loop_footer_branch
    %12 = sbr.rel target = $region3
  $region8: #{tpu_custom_call.1} parent=0 // loop_exit
    _

</llo_original>
